<compile_context>
chip_gen: v6e
topology: v6e:2x2x1
jax: 0.10.0
libtpu: 0.0.40
codegen_flags: <defaults>
</compile_context>

<pallas_src>
import functools

import jax
import jax.numpy as jnp
from jax import lax
from jax.experimental import pallas as pl
from jax.experimental.pallas import tpu as pltpu


def _round_up(x, m):
    return ((x + m - 1) // m) * m


# ---------------------------------------------------------------------------
# Pass 1: per-row inverse L2 norms, inv[r] = rsqrt(sum_d f[r, d]^2)
# (zero rows -- including padded rows -- get inv = 0 so their cosine row/col is 0)
# ---------------------------------------------------------------------------
def _inv_norm_kernel(f_ref, inv_ref):
    k = pl.program_id(1)
    nk = pl.num_programs(1)

    @pl.when(k == 0)
    def _():
        inv_ref[...] = jnp.zeros_like(inv_ref)

    x = f_ref[...].astype(jnp.float32)
    inv_ref[...] += jnp.sum(x * x, axis=1, keepdims=True)

    @pl.when(k == nk - 1)
    def _():
        ss = inv_ref[...]
        inv_ref[...] = jnp.where(ss > 0.0, lax.rsqrt(ss), jnp.zeros_like(ss))


# ---------------------------------------------------------------------------
# Pass 2: tiled SP loss.  Output is per-row partial sum of squared differences.
# ---------------------------------------------------------------------------
def _sp_loss_kernel(fi_ref, fj_ref, invi_ref, invj_ref, ti_ref, tj_ref,
                    o_ref, gram_ref, *, batch, block_m, block_n, padded):
    i = pl.program_id(0)
    j = pl.program_id(1)
    k = pl.program_id(2)
    nk = pl.num_programs(2)

    # Per-row accumulator (resident across the j and k reduction axes).
    @pl.when((j == 0) & (k == 0))
    def _():
        o_ref[...] = jnp.zeros_like(o_ref)

    # Gram tile accumulator over the feature (k) axis.
    @pl.when(k == 0)
    def _():
        gram_ref[...] = jnp.zeros_like(gram_ref)

    # A @ B^T: contract the last (lane) dim of both operands -> no transpose,
    # native (sublane=rows, lane=features) layout straight into the MXU.
    gram_ref[...] += lax.dot_general(
        fi_ref[...], fj_ref[...],
        dimension_numbers=(((1,), (1,)), ((), ())),
        preferred_element_type=jnp.float32)

    @pl.when(k == nk - 1)
    def _():
        # Cosine similarity via precomputed inverse norms (no (B,B) divide).
        sp_feats = gram_ref[...] * invi_ref[...] * invj_ref[...]
        # Label-equality target; labels supplied in both orientations -> no transpose.
        sp_tar = (ti_ref[...] == tj_ref[...]).astype(jnp.float32)
        diff = sp_tar - sp_feats
        if padded:  # static: only emitted when the batch was padded
            rows = i * block_m + lax.broadcasted_iota(jnp.int32, diff.shape, 0)
            cols = j * block_n + lax.broadcasted_iota(jnp.int32, diff.shape, 1)
            valid = (rows < batch) & (cols < batch)
            diff = jnp.where(valid, diff, 0.0)
        o_ref[...] += jnp.sum(diff * diff, axis=1, keepdims=True)


def similarity_preserving_loss(features, target, feat_dim=256,
                               block_rows=None, block_k=None):
    assert features.shape[-1] == feat_dim, "feat_dim should be consistent"
    B, D = features.shape
    assert B == target.shape[0], "batch size should be consistent"

    # Row tile (used for both i and j tiles).  The lane-facing aux blocks are
    # (1, block_rows), so block_rows must be a multiple of 128 or span the whole
    # padded batch.
    if block_rows is None:
        block_rows = _round_up(B, 8) if B <= 256 else 256
    block_rows = max(8, block_rows)
    assert block_rows % 8 == 0
    Bp = _round_up(B, block_rows)
    assert block_rows == Bp or block_rows % 128 == 0, \
        "block_rows must be a multiple of 128 or cover the whole padded batch"

    if block_k is None:
        block_k = _round_up(D, 128) if D <= 512 else 512
    assert block_k % 128 == 0
    Dp = _round_up(D, block_k)

    f = features  # keep native dtype (bf16 goes straight to the MXU)
    if (Bp, Dp) != (B, D):
        f = jnp.pad(f, ((0, Bp - B), (0, Dp - D)))
    t = target.astype(jnp.int32)
    if Bp != B:
        t = jnp.pad(t, (0, Bp - B))

    tm = tn = block_rows
    tk = block_k
    ni = Bp // tm
    nk = Dp // tk

    # ---- pass 1: inverse row norms (Bp, 1) ----
    inv = pl.pallas_call(
        _inv_norm_kernel,
        out_shape=jax.ShapeDtypeStruct((Bp, 1), jnp.float32),
        grid=(ni, nk),
        in_specs=[pl.BlockSpec((tm, tk), lambda i, k: (i, k))],
        out_specs=pl.BlockSpec((tm, 1), lambda i, k: (i, 0)),
        compiler_params=pltpu.CompilerParams(
            dimension_semantics=("parallel", "arbitrary")),
    )(f)

    inv_col = inv                    # (Bp, 1)  row orientation
    inv_row = inv.reshape(1, Bp)     # (1, Bp)  column orientation
    t_col = t.reshape(Bp, 1)
    t_row = t.reshape(1, Bp)

    kernel = functools.partial(
        _sp_loss_kernel,
        batch=B, block_m=tm, block_n=tn, padded=(Bp != B))

    # ---- pass 2: per-row partial sums of squared differences ----
    row_ss = pl.pallas_call(
        kernel,
        out_shape=jax.ShapeDtypeStruct((Bp, 1), jnp.float32),
        grid=(ni, ni, nk),
        in_specs=[
            pl.BlockSpec((tm, tk), lambda i, j, k: (i, k)),   # features, row tile i
            pl.BlockSpec((tn, tk), lambda i, j, k: (j, k)),   # features, row tile j
            pl.BlockSpec((tm, 1), lambda i, j, k: (i, 0)),    # inv norms (rows)
            pl.BlockSpec((1, tn), lambda i, j, k: (0, j)),    # inv norms (cols)
            pl.BlockSpec((tm, 1), lambda i, j, k: (i, 0)),    # labels (rows)
            pl.BlockSpec((1, tn), lambda i, j, k: (0, j)),    # labels (cols)
        ],
        out_specs=pl.BlockSpec((tm, 1), lambda i, j, k: (i, 0)),
        scratch_shapes=[pltpu.VMEM((tm, tn), jnp.float32)],
        compiler_params=pltpu.CompilerParams(
            dimension_semantics=("parallel", "arbitrary", "arbitrary")),
    )(f, f, inv_col, inv_row, t_col, t_row)

    # Tiny O(B) epilogue: Frobenius norm from per-row partial sums.
    return jnp.sqrt(jnp.sum(row_ss))


# ---------------------------------------------------------------------------
# Pure-JAX reference (mirrors the PyTorch module)
# ---------------------------------------------------------------------------
def _reference(features, target):
    f = features.astype(jnp.float32)
    sp_tar = (target[None, :] == target[:, None]).astype(jnp.float32)
    norms = jnp.linalg.norm(f, axis=1)
    sp_feats = (f @ f.T) / (norms[:, None] * norms[None, :])
    return jnp.linalg.norm(sp_tar - sp_feats)


if __name__ == "__main__":
    key = jax.random.PRNGKey(0)
    k1, k2, k3, k4 = jax.random.split(key, 4)

    # Test 1: small batch (padded 6 -> 8 rows), single tile, default feat_dim.
    B1, D1 = 6, 256
    feats1 = jax.random.normal(k1, (B1, D1), dtype=jnp.float32)
    tgt1 = jax.random.randint(k2, (B1,), 0, 4, dtype=jnp.int32)
    loss1 = jax.block_until_ready(
        similarity_preserving_loss(feats1, tgt1, feat_dim=D1))
    ref1 = _reference(feats1, tgt1)
    assert jnp.allclose(loss1, ref1, rtol=1e-5, atol=1e-5), (loss1, ref1)

    # Test 2: exercises the multi-tile (i, j, k) grid, padding mask, accumulation.
    B2, D2 = 160, 256
    feats2 = jax.random.normal(k3, (B2, D2), dtype=jnp.float32)
    tgt2 = jax.random.randint(k4, (B2,), 0, 10, dtype=jnp.int32)
    loss2 = jax.block_until_ready(
        similarity_preserving_loss(feats2, tgt2, feat_dim=D2,
                                   block_rows=128, block_k=128))
    ref2 = _reference(feats2, tgt2)
    assert jnp.allclose(loss2, ref2, rtol=1e-4, atol=1e-4), (loss2, ref2)

    print("KERNEL_OK")
</pallas_src>

<mosaic_0001>
module attributes {stable_mosaic.version = 11 : i64} {
  func.func @_inv_norm_kernel(%arg0: i32, %arg1: i32, %arg2: memref<8x256xf32, #tpu.memory_space<vmem>>, %arg3: memref<8x1xf32, #tpu.memory_space<vmem>>) attributes {dimension_semantics = [#tpu.dimension_semantics<parallel>, #tpu.dimension_semantics<arbitrary>], iteration_bounds = array<i64: 1, 1>, scalar_prefetch = 0 : i64, scratch_operands = 0 : i64, tpu.core_type = #tpu.core_type<tc>, window_params = [{transform_indices = @transform_0, window_bounds = array<i64: 8, 256>}, {transform_indices = @transform_1, window_bounds = array<i64: 8, 1>}]} {
    %c0_i32 = arith.constant 0 : i32
    %0 = arith.cmpi eq, %arg1, %c0_i32 : i32
    %1 = arith.extui %0 : i1 to i32
    %c0_i32_0 = arith.constant 0 : i32
    %2 = arith.cmpi ne, %1, %c0_i32_0 : i32
    scf.if %2 {
      %cst_8 = arith.constant 0.000000e+00 : f32
      %13 = vector.broadcast %cst_8 : f32 to vector<8x1xf32>
      %c0_9 = arith.constant 0 : index
      %c0_10 = arith.constant 0 : index
      %14 = vector.load %arg3[%c0_9, %c0_10] : memref<8x1xf32, #tpu.memory_space<vmem>>, vector<8x1xf32>
      tpu.vector_store %arg3[%c0_9, %c0_10], %13 {strides = array<i32>} : memref<8x1xf32, #tpu.memory_space<vmem>>, vector<8x1xf32>,
    } else {
    }
    %c0 = arith.constant 0 : index
    %c0_1 = arith.constant 0 : index
    %3 = vector.load %arg2[%c0, %c0_1] : memref<8x256xf32, #tpu.memory_space<vmem>>, vector<8x256xf32>
    %c0_2 = arith.constant 0 : index
    %c0_3 = arith.constant 0 : index
    %4 = vector.load %arg3[%c0_2, %c0_3] : memref<8x1xf32, #tpu.memory_space<vmem>>, vector<8x1xf32>
    %5 = arith.mulf %3, %3 : vector<8x256xf32>
    %cst = arith.constant dense<0.000000e+00> : vector<8xf32>
    %6 = vector.multi_reduction <add>, %5, %cst [1] : vector<8x256xf32> to vector<8xf32>
    %7 = vector.shape_cast %6 : vector<8xf32> to vector<8x1xf32>
    %8 = arith.addf %4, %7 : vector<8x1xf32>
    %c0_4 = arith.constant 0 : index
    %c0_5 = arith.constant 0 : index
    %9 = vector.load %arg3[%c0_4, %c0_5] : memref<8x1xf32, #tpu.memory_space<vmem>>, vector<8x1xf32>
    tpu.vector_store %arg3[%c0_4, %c0_5], %8 {strides = array<i32>} : memref<8x1xf32, #tpu.memory_space<vmem>>, vector<8x1xf32>,
    %c0_i32_6 = arith.constant 0 : i32
    %10 = arith.cmpi eq, %arg1, %c0_i32_6 : i32
    %11 = arith.extui %10 : i1 to i32
    %c0_i32_7 = arith.constant 0 : i32
    %12 = arith.cmpi ne, %11, %c0_i32_7 : i32
    scf.if %12 {
      %c0_8 = arith.constant 0 : index
      %c0_9 = arith.constant 0 : index
      %13 = vector.load %arg3[%c0_8, %c0_9] : memref<8x1xf32, #tpu.memory_space<vmem>>, vector<8x1xf32>
      %cst_10 = arith.constant 0.000000e+00 : f32
      %14 = vector.broadcast %cst_10 : f32 to vector<8x1xf32>
      %15 = arith.cmpf ogt, %13, %14 : vector<8x1xf32>
      %16 = math.rsqrt %13 : vector<8x1xf32>
      %cst_11 = arith.constant 0.000000e+00 : f32
      %17 = vector.broadcast %cst_11 : f32 to vector<8x1xf32>
      %18 = arith.select %15, %16, %17 : vector<8x1xi1>, vector<8x1xf32>
      %c0_12 = arith.constant 0 : index
      %c0_13 = arith.constant 0 : index
      %19 = vector.load %arg3[%c0_12, %c0_13] : memref<8x1xf32, #tpu.memory_space<vmem>>, vector<8x1xf32>
      tpu.vector_store %arg3[%c0_12, %c0_13], %18 {strides = array<i32>} : memref<8x1xf32, #tpu.memory_space<vmem>>, vector<8x1xf32>,
    } else {
    }
    return
  }
  func.func @transform_0(%arg0: i32, %arg1: i32) -> (i32, i32) {
    %c0_i32 = arith.constant 0 : i32
    return %arg0, %arg1 : i32, i32
  }
  func.func @transform_1(%arg0: i32, %arg1: i32) -> (i32, i32) {
    %c0_i32 = arith.constant 0 : i32
    %c0_i32_0 = arith.constant 0 : i32
    return %arg0, %c0_i32 : i32, i32
  }
}

</mosaic_0001>

<llo_original>
// kernel: tpu_custom_call.1
$region0: #{tpu_custom_call.1}
  #allocation0 [shape = 'u32[]', space=smem, size = 0x4, offset = 0x4, fixed_abs, tag = 'smem constant byte address 0x4 - core index']
  #allocation1 [shape = 'u32[144,128]{1,0:T(1,128)}', space=vmem, size = 0x12000, scoped, tag = 'internal scratch']
  %s0 = inlined_call_operand.hbm [shape: f32[8,256], index: 0, kind: input, shape index: {}]
  %s1 = inlined_call_operand.vmem [shape: f32[8,1], index: 1, kind: output, shape index: {}]
  %s2 = sld [smem:[#allocation0]]
  $region26: #{tpu_custom_call.1} parent=0
    _
  %s4 = ssub.s32 1, %s2
  %s5 = scalar_select 0, %s4, %s2
  $region1: #{tpu_custom_call.1} parent=0
    #allocation2 [shape = 'u8[8192]{0}', space=vmem, size = 0x2000, scoped, tag = 'input window, operand 0, single buffered']
    #allocation3 [shape = 's32[1]{0}', space=sflag, size = 0x4, scoped, tag = 'scoped memory for tpu_custom_call.1']
    %6 = vsyncpa [#allocation3], 0
    // Predicated region
    $region2: #{tpu_custom_call.1} parent=1 // pred_check
      _
    $region3: #{tpu_custom_call.1} parent=1 // pred_check_branch
      %8 = sbr.rel (0) target = $region5
    $region4: #{tpu_custom_call.1} parent=1 // pred_region
      %s10 = ssub.s32 256, 256
      %11 = vsyncadd [#allocation3], %s10
      %s13 = sshll.u32 [#allocation2], 4
      %s14 = int_to_ptr.vmem [resolvable:$true] %s13
      %16 = dma.hbm_to_vmem [thread:$0]  %s0, 256, %s14, [#allocation3]
    $region5: #{tpu_custom_call.1} parent=1 // pred_fallthru
      _
    // Predicated region
    $region6: #{tpu_custom_call.1} parent=1 // pred_check
      _
    $region7: #{tpu_custom_call.1} parent=1 // pred_check_branch
      %18 = sbr.rel (0) target = $region9
    $region8: #{tpu_custom_call.1} parent=1 // pred_region
      %19 = dma.done [#allocation3], 256
    $region9: #{tpu_custom_call.1} parent=1 // pred_fallthru
      _
    %p20 = scmp.eq.s32.totalorder 0, 0
    // Predicated region
    $region10: #{tpu_custom_call.1} parent=1 // pred_check
      %p21 = pneg %p20
    $region11: #{tpu_custom_call.1} parent=1 // pred_check_branch
      %23 = sbr.rel (%p21) target = $region13
    $region12: #{tpu_custom_call.1} parent=1 // pred_region
      %vm24 = vcmask 7168
      %25 = vst.msk [vmem:[%s1] sm:$0xff] %vm24, 0.0
    $region13: #{tpu_custom_call.1} parent=1 // pred_fallthru
      _
    %v26 = vld [vmem:[#allocation2] sm:$0xff]
    %v27 = vld [vmem:[#allocation2 + $0x8] sm:$0xff]
    %v28 = vld [vmem:[%s1] sm:$0xff]
    %v29 = vmul.f32 %v26, %v26
    %v30 = vmul.f32 %v27, %v27
    %v31 = vadd.f32 %v29, %v30
    %32 = vadd.xlane.f32.xlu0 %v31
    %v33 = vpop.xlane.xlu0 %32
    %v34 = vadd.f32 %v28, %v33
    %vm35 = vcmask 7168
    %36 = vst.msk [vmem:[%s1] sm:$0xff] %vm35, %v34
    // Predicated region
    $region14: #{tpu_custom_call.1} parent=1 // pred_check
      %p37 = pneg %p20
    $region15: #{tpu_custom_call.1} parent=1 // pred_check_branch
      %39 = sbr.rel (%p37) target = $region17
    $region16: #{tpu_custom_call.1} parent=1 // pred_region
      %v40 = vld [vmem:[%s1] sm:$0xff]
      %vm41 = vcmp.gt.f32.partialorder %v40, 0.0
      %v42 = vrsqrt.pop %v40
      %v43 = vsel %vm41, %v42, 0.0
      %44 = vst.msk [vmem:[%s1] sm:$0xff] %vm35, %v43
    $region17: #{tpu_custom_call.1} parent=1 // pred_fallthru
      _
    // Predicated region
    $region18: #{tpu_custom_call.1} parent=1 // pred_check
      _
    $region19: #{tpu_custom_call.1} parent=1 // pred_check_branch
      %46 = sbr.rel (0) target = $region21
    $region20: #{tpu_custom_call.1} parent=1 // pred_region
      _
    $region21: #{tpu_custom_call.1} parent=1 // pred_fallthru
      _
    // Predicated region
    $region22: #{tpu_custom_call.1} parent=1 // pred_check
      _
    $region23: #{tpu_custom_call.1} parent=1 // pred_check_branch
      %48 = sbr.rel (0) target = $region25
    $region24: #{tpu_custom_call.1} parent=1 // pred_region
      _
    $region25: #{tpu_custom_call.1} parent=1 // pred_fallthru
      _
    %49 = vsyncpa [#allocation3], 1

</llo_original>
